<compile_context>
chip_gen: v6e
topology: v6e:2x2x1
jax: 0.10.0
libtpu: 0.0.40
codegen_flags: <defaults>
</compile_context>

<pallas_src>
import math

import jax
import jax.numpy as jnp
from jax.experimental import pallas as pl
from jax.experimental.pallas import tpu as pltpu


def _feature_importance_kernel(w_ref, x_ref, o_ref):
    # w_ref: (1, L)   softmaxed, lane-tiled weights (resident in VMEM for all steps)
    # x_ref: (bR, L)  input tile
    # o_ref: (bR, L)  output tile
    o_ref[...] = x_ref[...] * w_ref[...]          # broadcast over rows, VPU only


def _cdiv(a, b):
    return -(-a // b)


def _tpu_generation_defaults():
    """Return (default per-buffer tile budget, VMEM-limit cap) for this TPU gen."""
    vmem_cap = None
    try:
        vmem_cap = int(pltpu.get_tpu_info().vmem_capacity_bytes)
    except Exception:
        vmem_cap = None
    kind = ""
    try:
        kind = jax.devices()[0].device_kind.lower()
    except Exception:
        pass
    if vmem_cap is not None and vmem_cap <= (64 << 20):
        # v7x-class (64 MiB/TC, ~3.2 TB/s HBM): bigger tiles amortize the
        # ~0.35 us per-grid-step overhead while staying under the per-TC cap.
        return 10 << 20, min(vmem_cap - (8 << 20), 56 << 20)
    if ("v5 lite" in kind) or ("v5e" in kind) or ("v5lite" in kind):
        # v5e (~820 GB/s HBM): 4 MiB tiles already amortize per-step overhead.
        return 4 << 20, 64 << 20
    # v6e and other 128-MiB-VMEM parts: plenty of headroom.
    return 12 << 20, 96 << 20


def _choose_block_rows(rows, row_bytes, sub, budget_bytes):
    """Sublane-aligned row block; no exact-divisor requirement (cdiv grid)."""
    if rows <= sub:
        return rows                                     # single full-extent block
    fit = max(sub, (budget_bytes // max(row_bytes, 1)) // sub * sub)
    # Guarantee >= 2 grid steps so v7x's two TensorCores both get a DMA stream.
    half = max(sub, _cdiv(_cdiv(rows, 2), sub) * sub)
    return min(fit, half, rows)


def feature_importance(x, raw_weights, *, vmem_block_bytes=None,
                       donate_x=False, small_input_bypass_bytes=64 * 1024):
    """x: (B, S, F); raw_weights: (F,) pre-softmax parameters."""
    B, S, F = x.shape
    itemsize = jnp.dtype(x.dtype).itemsize

    # Hoisted softmax: one tiny O(F) op; the kernel stays a pure multiply.
    sm = jax.nn.softmax(raw_weights.astype(jnp.float32), axis=0).astype(x.dtype)

    # Tiny-input bypass: pallas_call / DMA-pipeline setup dwarfs a few vregs of work.
    if x.size * itemsize < small_input_bypass_bytes:
        return x * sm.reshape(1, 1, F)

    default_block, vmem_cap_limit = _tpu_generation_defaults()
    if vmem_block_bytes is None:
        vmem_block_bytes = default_block
    # Never let the per-buffer budget push the total VMEM request past the cap
    # (in + out double-buffered = 4 tiles, + weight row + slack).
    vmem_block_bytes = max(64 * 1024,
                           min(vmem_block_bytes, (vmem_cap_limit - (4 << 20)) // 5))

    # Lane packing: last dim becomes L = lcm(F, 128), always a multiple of 128.
    n_rows_flat = B * S
    k = 128 // math.gcd(F, 128)               # smallest k with (k*F) % 128 == 0
    pad = (-n_rows_flat) % k                  # pad a handful of rows (not k=1 fallback)
    x_flat = x.reshape(n_rows_flat, F)
    if pad:
        x_flat = jnp.pad(x_flat, ((0, pad), (0, 0)))
    rows = (n_rows_flat + pad) // k
    L = k * F
    x2 = x_flat.reshape(rows, L)
    w_row = jnp.tile(sm, k).reshape(1, L)     # per-lane weight pattern

    sub = 8 * max(1, 4 // itemsize)           # sublane quantum: 8 (f32) / 16 (bf16)
    block_rows = _choose_block_rows(rows, L * itemsize, sub, vmem_block_bytes)
    grid = (pl.cdiv(rows, block_rows),)       # ragged last block handled by Pallas

    block_bytes = block_rows * L * itemsize
    w_bytes = L * itemsize
    vmem_limit = int(min(vmem_cap_limit,
                         max(16 << 20, 4 * block_bytes + w_bytes + (2 << 20))))

    out2 = pl.pallas_call(
        _feature_importance_kernel,
        out_shape=jax.ShapeDtypeStruct((rows, L), x.dtype),
        grid_spec=pltpu.PrefetchScalarGridSpec(
            num_scalar_prefetch=0,
            grid=grid,
            in_specs=[
                # Weight row: whole array resident in VMEM across all grid steps.
                pl.BlockSpec(memory_space=pltpu.MemorySpace.VMEM),
                pl.BlockSpec((block_rows, L), lambda i: (i, 0)),     # x tile
            ],
            out_specs=pl.BlockSpec((block_rows, L), lambda i: (i, 0)),
        ),
        compiler_params=pltpu.CompilerParams(
            dimension_semantics=("parallel",),
            vmem_limit_bytes=vmem_limit,
        ),
        cost_estimate=pl.CostEstimate(
            flops=rows * L,
            transcendentals=0,                          # softmax is in the wrapper
            bytes_accessed=(2 * rows * L + L) * itemsize,
        ),
        # Footprint-only win: reuse x2's HBM buffer for the output when donated.
        input_output_aliases=({1: 0} if donate_x else {}),
    )(w_row, x2)

    out_flat = out2.reshape(rows * k, F)
    if pad:
        out_flat = out_flat[:n_rows_flat]
    return out_flat.reshape(B, S, F)


if __name__ == "__main__":
    key0, key1, key2 = jax.random.split(jax.random.PRNGKey(0), 3)

    # --- Small shape consistent with the module (batch=2, seq=8, features=32).
    #     Bypass disabled so the Pallas kernel itself is exercised.
    B, S, F = 2, 8, 32
    x = jax.random.normal(key0, (B, S, F), dtype=jnp.float32)
    raw_weights = jnp.ones((F,), dtype=jnp.float32)      # nn.Parameter(torch.ones(F))
    out = jax.block_until_ready(
        feature_importance(x, raw_weights, small_input_bypass_bytes=0))
    ref = x * jax.nn.softmax(raw_weights, axis=0)[None, None, :]
    assert out.shape == (B, S, F)
    assert jnp.allclose(out, ref, atol=1e-6, rtol=1e-6), "mismatch (small)"

    # --- Larger shape: lane packing (F=96 -> L=384), multi-block cdiv grid with
    #     a ragged last block (1000 rows, 168-row blocks).
    B2, S2, F2 = 4, 1000, 96
    x2 = jax.random.normal(key1, (B2, S2, F2), dtype=jnp.float32)
    w2 = jax.random.normal(key1, (F2,), dtype=jnp.float32)
    out2 = jax.block_until_ready(
        feature_importance(x2, w2, vmem_block_bytes=256 * 1024))
    ref2 = x2 * jax.nn.softmax(w2, axis=0)[None, None, :]
    assert out2.shape == (B2, S2, F2)
    assert jnp.allclose(out2, ref2, atol=1e-6, rtol=1e-6), "mismatch (tiled/ragged)"

    # --- Row-padding path: B*S (=15) not a multiple of the packing factor k (=4).
    B3, S3, F3 = 3, 5, 96
    x3 = jax.random.normal(key2, (B3, S3, F3), dtype=jnp.float32)
    w3 = jax.random.normal(key2, (F3,), dtype=jnp.float32)
    out3 = jax.block_until_ready(
        feature_importance(x3, w3, small_input_bypass_bytes=0))
    ref3 = x3 * jax.nn.softmax(w3, axis=0)[None, None, :]
    assert out3.shape == (B3, S3, F3)
    assert jnp.allclose(out3, ref3, atol=1e-6, rtol=1e-6), "mismatch (padded rows)"

    print("KERNEL_OK")
</pallas_src>

<mosaic_0001>
module attributes {stable_mosaic.version = 11 : i64} {
  func.func @_feature_importance_kernel(%arg0: i32, %arg1: memref<1x128xf32, #tpu.memory_space<vmem>>, %arg2: memref<4x128xf32, #tpu.memory_space<vmem>>, %arg3: memref<4x128xf32, #tpu.memory_space<vmem>>) attributes {dimension_semantics = [#tpu.dimension_semantics<parallel>], iteration_bounds = array<i64: 1>, scalar_prefetch = 0 : i64, scratch_operands = 0 : i64, tpu.core_type = #tpu.core_type<tc>, window_params = [{pipeline_mode = #tpu.pipeline_mode<synchronous>, transform_indices = @transform_0, window_bounds = array<i64: 1, 128>}, {transform_indices = @transform_1, window_bounds = array<i64: 4, 128>}, {transform_indices = @transform_2, window_bounds = array<i64: 4, 128>}]} {
    %c0 = arith.constant 0 : index
    %c0_0 = arith.constant 0 : index
    %0 = vector.load %arg2[%c0, %c0_0] : memref<4x128xf32, #tpu.memory_space<vmem>>, vector<4x128xf32>
    %c0_1 = arith.constant 0 : index
    %c0_2 = arith.constant 0 : index
    %1 = vector.load %arg1[%c0_1, %c0_2] : memref<1x128xf32, #tpu.memory_space<vmem>>, vector<1x128xf32>
    %2 = vector.broadcast %1 : vector<1x128xf32> to vector<4x128xf32>
    %3 = arith.mulf %0, %2 : vector<4x128xf32>
    %c0_3 = arith.constant 0 : index
    %c0_4 = arith.constant 0 : index
    %4 = vector.load %arg3[%c0_3, %c0_4] : memref<4x128xf32, #tpu.memory_space<vmem>>, vector<4x128xf32>
    tpu.vector_store %arg3[%c0_3, %c0_4], %3 {strides = array<i32>} : memref<4x128xf32, #tpu.memory_space<vmem>>, vector<4x128xf32>,
    return
  }
  func.func @transform_0(%arg0: i32) -> (i32, i32) {
    %c0_i32 = arith.constant 0 : i32
    %c0_i32_0 = arith.constant 0 : i32
    %c0_i32_1 = arith.constant 0 : i32
    return %c0_i32, %c0_i32_0 : i32, i32
  }
  func.func @transform_1(%arg0: i32) -> (i32, i32) {
    %c0_i32 = arith.constant 0 : i32
    %c0_i32_0 = arith.constant 0 : i32
    return %arg0, %c0_i32 : i32, i32
  }
  func.func @transform_2(%arg0: i32) -> (i32, i32) {
    %c0_i32 = arith.constant 0 : i32
    %c0_i32_0 = arith.constant 0 : i32
    return %arg0, %c0_i32 : i32, i32
  }
}

</mosaic_0001>

<llo_original>
// kernel: tpu_custom_call.1
$region0: #{tpu_custom_call.1}
  #allocation0 [shape = 'u32[]', space=smem, size = 0x4, offset = 0x4, fixed_abs, tag = 'smem constant byte address 0x4 - core index']
  #allocation1 [shape = 'u32[144,128]{1,0:T(1,128)}', space=vmem, size = 0x12000, scoped, tag = 'internal scratch']
  %s0 = inlined_call_operand.hbm [shape: f32[1,128], index: 0, kind: input, shape index: {}]
  %s1 = inlined_call_operand.hbm [shape: f32[4,128], index: 1, kind: input, shape index: {}]
  %s2 = inlined_call_operand.hbm [shape: f32[4,128], index: 2, kind: output, shape index: {}]
  %s3 = sld [smem:[#allocation0]]
  $region26: #{tpu_custom_call.1} parent=0
    _
  %s5 = ssub.s32 1, %s3
  %s6 = scalar_select 0, %s5, %s3
  $region1: #{tpu_custom_call.1} parent=0
    #allocation2 [shape = 'u8[512]{0}', space=vmem, size = 0x400, scoped, tag = 'input window, operand 0, single buffered']
    #allocation3 [shape = 's32[1]{0}', space=sflag, size = 0x4, scoped, tag = 'scoped memory for tpu_custom_call.1']
    #allocation4 [shape = 's32[1]{0}', space=sflag, size = 0x4, scoped, tag = 'scoped memory for tpu_custom_call.1']
    #allocation5 [shape = 'u8[2048]{0}', space=vmem, size = 0x800, scoped, tag = 'input window, operand 1, single buffered']
    #allocation6 [shape = 's32[1]{0}', space=sflag, size = 0x4, scoped, tag = 'scoped memory for tpu_custom_call.1']
    #allocation7 [shape = 'u8[2048]{0}', space=vmem, size = 0x800, scoped, tag = 'output window, operand 0, single buffered']
    %7 = vsyncpa [#allocation3], 0
    %8 = vsyncpa [#allocation6], 0
    %9 = vsyncpa [#allocation4], 0
    // Predicated region
    $region2: #{tpu_custom_call.1} parent=1 // pred_check
      _
    $region3: #{tpu_custom_call.1} parent=1 // pred_check_branch
      %11 = sbr.rel (0) target = $region5
    $region4: #{tpu_custom_call.1} parent=1 // pred_region
      %s13 = ssub.s32 16, 16
      %14 = vsyncadd [#allocation3], %s13
      %s16 = sshll.u32 [#allocation2], 4
      %s17 = int_to_ptr.vmem [resolvable:$true] %s16
      %19 = dma.hbm_to_vmem [thread:$0]  %s0, 16, %s17, [#allocation3]
    $region5: #{tpu_custom_call.1} parent=1 // pred_fallthru
      _
    // Predicated region
    $region6: #{tpu_custom_call.1} parent=1 // pred_check
      _
    $region7: #{tpu_custom_call.1} parent=1 // pred_check_branch
      %21 = sbr.rel (0) target = $region9
    $region8: #{tpu_custom_call.1} parent=1 // pred_region
      %s23 = ssub.s32 64, 64
      %24 = vsyncadd [#allocation6], %s23
      %s26 = sshll.u32 [#allocation5], 4
      %s27 = int_to_ptr.vmem [resolvable:$true] %s26
      %29 = dma.hbm_to_vmem [thread:$0]  %s1, 64, %s27, [#allocation6]
    $region9: #{tpu_custom_call.1} parent=1 // pred_fallthru
      _
    // Predicated region
    $region10: #{tpu_custom_call.1} parent=1 // pred_check
      _
    $region11: #{tpu_custom_call.1} parent=1 // pred_check_branch
      %31 = sbr.rel (0) target = $region13
    $region12: #{tpu_custom_call.1} parent=1 // pred_region
      %32 = dma.done [#allocation3], 16
    $region13: #{tpu_custom_call.1} parent=1 // pred_fallthru
      _
    // Predicated region
    $region14: #{tpu_custom_call.1} parent=1 // pred_check
      _
    $region15: #{tpu_custom_call.1} parent=1 // pred_check_branch
      %34 = sbr.rel (0) target = $region17
    $region16: #{tpu_custom_call.1} parent=1 // pred_region
      %35 = dma.done [#allocation6], 64
    $region17: #{tpu_custom_call.1} parent=1 // pred_fallthru
      _
    %v36 = vld [vmem:[#allocation5] sm:$0xf]
    %v37 = vld [vmem:[#allocation2] sm:$0x1]
    %v39 = vlaneseq
    %v40 = vshrl.u32 %v39, 7
    %v41 = vsub.s32 0, %v40
    %v42 = vrot.slane %v37, %v41
    %v44 = vmul.f32 %v36, %v42
    %45 = vst [vmem:[#allocation7] sm:$0xf] %v44
    // Predicated region
    $region18: #{tpu_custom_call.1} parent=1 // pred_check
      _
    $region19: #{tpu_custom_call.1} parent=1 // pred_check_branch
      %47 = sbr.rel (0) target = $region21
    $region20: #{tpu_custom_call.1} parent=1 // pred_region
      %s49 = ssub.s32 64, 64
      %50 = vsyncadd [#allocation4], %s49
      %s52 = sshll.u32 [#allocation7], 4
      %s53 = int_to_ptr.vmem [resolvable:$true] %s52
      %55 = dma.vmem_to_hbm [thread:$0]  %s53, 64, %s2, [#allocation4]
    $region21: #{tpu_custom_call.1} parent=1 // pred_fallthru
      _
    // Predicated region
    $region22: #{tpu_custom_call.1} parent=1 // pred_check
      _
    $region23: #{tpu_custom_call.1} parent=1 // pred_check_branch
      %57 = sbr.rel (0) target = $region25
    $region24: #{tpu_custom_call.1} parent=1 // pred_region
      %58 = dma.done [#allocation4], 64
    $region25: #{tpu_custom_call.1} parent=1 // pred_fallthru
      _
    %59 = vsyncpa [#allocation3], 1
    %60 = vsyncpa [#allocation6], 1
    %61 = vsyncpa [#allocation4], 1

</llo_original>
